<compile_context>
chip_gen: v7x
topology: tpu7x:2x2x1
jax: 0.10.0
libtpu: 0.0.40
codegen_flags: <defaults>
</compile_context>

<pallas_src>
import jax
import jax.numpy as jnp
from jax.experimental import pallas as pl
from jax.experimental.pallas import tpu as pltpu


# -----------------------------------------------------------------------------
# Pallas kernel: out[b, f, :] = x[b, f, :] + pe[f, :]   (x viewed as (B, F, N*D))
# -----------------------------------------------------------------------------
def _pe_add_kernel(x_ref, pe_ref, o_ref):
    # x_ref / o_ref block: (Bt, Ft, N*D); pe_ref block: (Ft, N*D)
    o_ref[...] = x_ref[...] + pe_ref[...][None, :, :]


def _device_config():
    """(target_block_bytes, vmem_limit_bytes, min_batch_grid_steps) per TPU gen."""
    try:
        kind = jax.devices()[0].device_kind.lower()
    except Exception:
        kind = ""
    if "v5" in kind or "v6" in kind:
        # 128 MiB physical VMEM, 1 TensorCore per chip: big blocks amortize the
        # ~0.35 us per-grid-step overhead and keep DMAs long & contiguous.
        return 12 << 20, 96 << 20, 1
    # v7x (64 MiB VMEM per TC, 2 TCs per chip) and unknown chips: conservative
    # VMEM budget, and keep >= 2 batch grid steps so both cores drive DMAs.
    return 6 << 20, 48 << 20, 2


def _choose_tiles(B, F, ND, itemsize, target_bytes, min_batch_steps):
    """Pick (Bt, Ft) so a (Bt, Ft, ND) block is <= ~target_bytes.

    Prefers Ft == F (batch-major, fully contiguous HBM blocks; pe block index
    constant so pe is fetched once).  Only splits F when a single batch slab
    exceeds the target.  Uses a cdiv grid, so no exact-divisor requirement;
    Ft is aligned to the dtype's sublane packing when F is split.
    """
    sublane = 8 * (4 // max(1, itemsize))      # f32: 8, bf16: 16, int8: 32
    row_bytes = ND * itemsize                  # one (frame, all-agents) row
    slab_bytes = F * row_bytes                 # one full batch element
    if slab_bytes <= target_bytes:
        Ft = F
        Bt = max(1, min(B, target_bytes // slab_bytes))
        if min_batch_steps >= 2 and B >= 2:
            Bt = min(Bt, -(-B // 2))           # ensure >= 2 batch grid steps (v7x, 2 TCs)
    else:
        Bt = 1
        Ft = (target_bytes // row_bytes) // sublane * sublane
        Ft = min(max(Ft, sublane), F)          # sublane-aligned, or full F (always legal)
    return Bt, Ft


def add_traj_id_encoding(x, pe, *, target_block_bytes=None, vmem_limit_bytes=None):
    """out[b, f, n, :] = x[b, f, n, :] + pe[f, n, :]  (broadcast over batch).

    x: (B, F, N, D);  pe: (F, N*D), same dtype as x  ->  (B, F, N, D).

    Note: the output aliases x (input_output_aliases={0: 0}).  The add happens
    truly in place only if the caller donates x (jax.jit donate_argnums) or x is
    dead after this call; otherwise XLA inserts a defensive copy of x.
    """
    B, F, N, D = x.shape
    ND = N * D
    assert pe.shape == (F, ND), (pe.shape, (F, ND))
    assert pe.dtype == x.dtype
    tgt_default, vmem_default, min_batch_steps = _device_config()
    target = target_block_bytes if target_block_bytes is not None else tgt_default
    vmem = vmem_limit_bytes if vmem_limit_bytes is not None else vmem_default

    x3 = x.reshape(B, F, ND)                   # lane-dense last dim (full extent)
    Bt, Ft = _choose_tiles(B, F, ND, x.dtype.itemsize, target, min_batch_steps)
    # Frames OUTER / batch INNER: pe block index is constant across the inner
    # batch sweep -> pe is DMA'd at most cdiv(F, Ft) times total (once when Ft==F).
    grid = (pl.cdiv(F, Ft), pl.cdiv(B, Bt))
    out = pl.pallas_call(
        _pe_add_kernel,
        out_shape=jax.ShapeDtypeStruct((B, F, ND), x.dtype),
        grid=grid,
        in_specs=[
            pl.BlockSpec((Bt, Ft, ND), lambda f, b: (b, f, 0)),
            pl.BlockSpec((Ft, ND), lambda f, b: (f, 0)),
        ],
        out_specs=pl.BlockSpec((Bt, Ft, ND), lambda f, b: (b, f, 0)),
        input_output_aliases={0: 0},           # in place only if x is donated/dead
        compiler_params=pltpu.CompilerParams(
            dimension_semantics=("parallel", "parallel"),
            vmem_limit_bytes=vmem,
        ),
    )(x3, pe)
    return out.reshape(B, F, N, D)


# -----------------------------------------------------------------------------
# Module-equivalent wrapper (parameter setup + gather/interleave are plain JAX)
# -----------------------------------------------------------------------------
def _max_norm_renorm(rows, max_norm=1.0):
    # PyTorch nn.Embedding(max_norm=...) renorm on access:
    #   if ||row||_2 > max_norm: row *= max_norm / (||row||_2 + 1e-7)
    norms = jnp.linalg.norm(rows, axis=-1, keepdims=True)
    scale = jnp.where(norms > max_norm, max_norm / (norms + 1e-7), 1.0)
    return rows * scale


class LearnedTrajandIDEncodingPallas:
    def __init__(self, d_model, dropout=0.1, max_len=5000,
                 max_obs_len=200, max_pred_len=300, key=None):
        if key is None:
            key = jax.random.PRNGKey(0)
        k_obs, k_pred, k_person = jax.random.split(key, 3)
        half = d_model // 2
        # nn.Embedding default init: N(0, 1)
        self.w_obs = jax.random.normal(k_obs, (max_obs_len, half), jnp.float32)
        self.w_pred = jax.random.normal(k_pred, (max_pred_len, half), jnp.float32)
        self.w_person = jax.random.normal(k_person, (1000, half), jnp.float32)
        self.d_model = d_model
        self.dropout_p = dropout

    def _build_pe(self, in_F, out_F, N, num_people, dtype):
        half = self.d_model // 2
        F = in_F + out_F
        obs = _max_norm_renorm(self.w_obs[:in_F])[::-1]          # (in_F, half), reversed
        pred = _max_norm_renorm(self.w_pred[:out_F])             # (out_F, half)
        traj = jnp.concatenate([obs, pred], axis=0)              # (F, half)
        person = _max_norm_renorm(self.w_person[:num_people])    # (P, half)
        even = jnp.broadcast_to(traj[:, None, :], (F, num_people, half))
        odd = jnp.broadcast_to(person[None, :, :], (F, num_people, half))
        # Interleave: pe[..., 0::2] = traj, pe[..., 1::2] = person
        pe = jnp.stack([even, odd], axis=-1).reshape(F, num_people, 2 * half)
        if 2 * half < self.d_model:        # odd d_model: last channel untouched
            pe = jnp.pad(pe, ((0, 0), (0, 0), (0, self.d_model - 2 * half)))
        if num_people != N:
            assert num_people == 1, "num_people must be 1 or equal to N"
            pe = jnp.broadcast_to(pe, (F, N, self.d_model))
        # Pre-cast to x.dtype: matches PyTorch's in-place add on an x-typed tensor.
        return pe.astype(dtype).reshape(F, N * self.d_model)

    def __call__(self, x, in_F, out_F, num_people=1):
        B, F, N, D = x.shape
        assert F == in_F + out_F and D == self.d_model
        pe = self._build_pe(in_F, out_F, N, num_people, x.dtype)
        out = add_traj_id_encoding(x, pe)
        # TODO(synk): nn.Dropout(p=0.1) is stochastic in training mode;
        # implemented here as eval-mode identity.
        return out


# -----------------------------------------------------------------------------
# Pure-JAX reference of the same forward semantics
# -----------------------------------------------------------------------------
def _reference(x, module, in_F, out_F, num_people):
    B, F, N, D = x.shape
    half = D // 2
    obs = _max_norm_renorm(module.w_obs[:in_F])[::-1]
    pred = _max_norm_renorm(module.w_pred[:out_F])
    traj = jnp.concatenate([obs, pred], axis=0)                  # (F, half)
    person = _max_norm_renorm(module.w_person[:num_people])      # (P, half)
    out = x
    out = out.at[:, :, :, 0:2 * half:2].add(traj[None, :, None, :])
    out = out.at[:, :, :, 1:2 * half:2].add(person[None, None, :, :])
    return out


# -----------------------------------------------------------------------------
# Demo / self-check
# -----------------------------------------------------------------------------
if __name__ == "__main__":
    key = jax.random.PRNGKey(0)
    k_x, k_params, k_x2, k_pe2, k_x3, k_pe3 = jax.random.split(key, 6)

    # Module-level demo: B=2, in_F=5, out_F=3 (F=8), N=4 agents, d_model=32.
    B, in_F, out_F, N, D = 2, 5, 3, 4, 32
    F = in_F + out_F
    x = jax.random.normal(k_x, (B, F, N, D), jnp.float32)
    module = LearnedTrajandIDEncodingPallas(d_model=D, key=k_params)

    out = jax.block_until_ready(module(x, in_F, out_F, num_people=N))
    ref = _reference(x, module, in_F, out_F, num_people=N)
    assert out.shape == (B, F, N, D)
    assert jnp.allclose(out, ref, atol=1e-6, rtol=1e-6)

    # num_people=1 broadcast path (the PyTorch default).
    out1 = jax.block_until_ready(module(x, in_F, out_F, num_people=1))
    ref1 = _reference(x, module, in_F, out_F, num_people=1)
    assert jnp.allclose(out1, ref1, atol=1e-6, rtol=1e-6)

    # Exercise the tiled / cdiv (non-divisor) kernel paths with tiny block targets.
    B2, F2, N2, D2 = 5, 12, 2, 64                       # N*D = 128 lanes; 5, 12 not tile-divisible
    x2 = jax.random.normal(k_x2, (B2, F2, N2, D2), jnp.float32)
    pe2 = jax.random.normal(k_pe2, (F2, N2 * D2), jnp.float32)
    ref2 = x2 + pe2.reshape(F2, N2, D2)[None]
    for tgt in (1 << 15, 1 << 12):                      # batch-tiled / frame-split cdiv grids
        out2 = jax.block_until_ready(
            add_traj_id_encoding(x2, pe2, target_block_bytes=tgt))
        assert jnp.allclose(out2, ref2, atol=1e-6, rtol=1e-6)

    # ND not a multiple of 128 (full-extent last dim stays legal; masked stores).
    B3, F3, N3, D3 = 3, 7, 3, 32                        # N*D = 96
    x3 = jax.random.normal(k_x3, (B3, F3, N3, D3), jnp.float32)
    pe3 = jax.random.normal(k_pe3, (F3, N3 * D3), jnp.float32)
    ref3 = x3 + pe3.reshape(F3, N3, D3)[None]
    out3 = jax.block_until_ready(add_traj_id_encoding(x3, pe3))
    assert jnp.allclose(out3, ref3, atol=1e-6, rtol=1e-6)

    print("KERNEL_OK")
</pallas_src>

<mosaic_0001>
module attributes {stable_mosaic.version = 11 : i64} {
  func.func @_pe_add_kernel(%arg0: i32, %arg1: i32, %arg2: memref<1x8x128xf32, #tpu.memory_space<vmem>>, %arg3: memref<8x128xf32, #tpu.memory_space<vmem>>, %arg4: memref<1x8x128xf32, #tpu.memory_space<vmem>>) attributes {dimension_semantics = [#tpu.dimension_semantics<parallel>, #tpu.dimension_semantics<parallel>], iteration_bounds = array<i64: 1, 2>, scalar_prefetch = 0 : i64, scratch_operands = 0 : i64, tpu.core_type = #tpu.core_type<tc>, window_params = [{transform_indices = @transform_0, window_bounds = array<i64: 1, 8, 128>}, {transform_indices = @transform_1, window_bounds = array<i64: 8, 128>}, {transform_indices = @transform_2, window_bounds = array<i64: 1, 8, 128>}]} {
    %c0 = arith.constant 0 : index
    %c0_0 = arith.constant 0 : index
    %c0_1 = arith.constant 0 : index
    %0 = vector.load %arg2[%c0, %c0_0, %c0_1] : memref<1x8x128xf32, #tpu.memory_space<vmem>>, vector<1x8x128xf32>
    %c0_2 = arith.constant 0 : index
    %c0_3 = arith.constant 0 : index
    %1 = vector.load %arg3[%c0_2, %c0_3] : memref<8x128xf32, #tpu.memory_space<vmem>>, vector<8x128xf32>
    %2 = vector.shape_cast %1 : vector<8x128xf32> to vector<1x8x128xf32>
    %3 = arith.addf %0, %2 : vector<1x8x128xf32>
    %c0_4 = arith.constant 0 : index
    %c0_5 = arith.constant 0 : index
    %c0_6 = arith.constant 0 : index
    %4 = vector.load %arg4[%c0_4, %c0_5, %c0_6] : memref<1x8x128xf32, #tpu.memory_space<vmem>>, vector<1x8x128xf32>
    tpu.vector_store %arg4[%c0_4, %c0_5, %c0_6], %3 {strides = array<i32>} : memref<1x8x128xf32, #tpu.memory_space<vmem>>, vector<1x8x128xf32>,
    return
  }
  func.func @transform_0(%arg0: i32, %arg1: i32) -> (i32, i32, i32) {
    %c0_i32 = arith.constant 0 : i32
    %c0_i32_0 = arith.constant 0 : i32
    return %arg1, %arg0, %c0_i32 : i32, i32, i32
  }
  func.func @transform_1(%arg0: i32, %arg1: i32) -> (i32, i32) {
    %c0_i32 = arith.constant 0 : i32
    %c0_i32_0 = arith.constant 0 : i32
    return %arg0, %c0_i32 : i32, i32
  }
  func.func @transform_2(%arg0: i32, %arg1: i32) -> (i32, i32, i32) {
    %c0_i32 = arith.constant 0 : i32
    %c0_i32_0 = arith.constant 0 : i32
    return %arg1, %arg0, %c0_i32 : i32, i32, i32
  }
}

</mosaic_0001>

<llo_original>
// kernel: tpu_custom_call.1
$region0: #{tpu_custom_call.1}
  #allocation0 [shape = 'u32[]', space=smem, size = 0x4, offset = 0x4, fixed_abs, tag = 'smem constant byte address 0x4 - core index']
  #allocation1 [shape = 'u32[144,128]{1,0:T(1,128)}', space=vmem, size = 0x12000, scoped, tag = 'internal scratch']
  %s0 = inlined_call_operand.hbm [shape: f32[2,8,128], index: 0, kind: input, shape index: {}, may-alias: {0,2}]
  %s1 = inlined_call_operand.vmem [shape: f32[8,128], index: 1, kind: input, shape index: {}]
  %s2 = inlined_call_operand.hbm [shape: f32[2,8,128], index: 2, kind: output, shape index: {}, may-alias: {0,2}]
  %s3 = sld [smem:[#allocation0]]
  $region45: #{tpu_custom_call.1} parent=0
    _
  %s5 = ssub.s32 1, %s3
  %s6 = scalar_select 0, %s5, %s3
  $region1: #{tpu_custom_call.1} parent=0
    #allocation2 [shape = 'u8[8192]{0}', space=vmem, size = 0x2000, scoped, tag = 'input window, operand 0']
    #allocation3 [shape = 's32[2]{0}', space=sflag, size = 0x8, scoped, tag = 'scoped memory for tpu_custom_call.1']
    #allocation4 [shape = 's32[2]{0}', space=sflag, size = 0x8, scoped, tag = 'scoped memory for tpu_custom_call.1']
    #allocation5 [shape = 'u8[8192]{0}', space=vmem, size = 0x2000, scoped, tag = 'output window, operand 0']
    %7 = vsyncpa [#allocation3], 0
    %s8 = scalar_lea.sflag [#allocation3], 1
    %9 = vsyncpa %s8, 0
    %10 = vsyncpa [#allocation4], 0
    %s11 = scalar_lea.sflag [#allocation4], 1
    %12 = vsyncpa %s11, 0
    loop: start=0, step=1, limit=4
    $region2: #{tpu_custom_call.1} parent=1 // loop_pre_header
      _
    $region3: #{tpu_custom_call.1} parent=1 // loop_header
      %s14 = sphi 0, %s18
      %p15 = scmp.ge.s32.totalorder %s14, 4
      %s21 = sphi 0, %s33
      %s22 = sphi 0, %s29
      %s23 = sphi 0, %s21
      %s24 = sphi 0, %s22
      %s25 = sphi 0, %s23
      %s26 = sphi 0, %s24
      %s38 = sphi 0, %s40
      %s41 = sphi 0, %s38
      %s42 = sphi 0, %s41
      %s58 = sphi 0, %s42
      %s64 = sphi 0, %s66
      %s67 = sphi 0, %s64
      %s68 = sphi 0, %s67
      %s84 = sphi 0, %s68
      %s92 = sphi 0, %s94
      %s95 = sphi 0, %s92
      %s96 = sphi 0, %s95
      %s112 = sphi 0, %s96
    $region4: #{tpu_custom_call.1} parent=1 // loop_header_branch
      %17 = sbr.rel (%p15) target = $region8
    $region5: #{tpu_custom_call.1} parent=1 // loop_body
      %s19 = ssub.s32 %s14, 1
      %s20 = ssub.s32 %s14, 2
      %s27 = sadd.s32 1, %s22
      %p28 = scmp.ge.s32.totalorder %s27, 2
      %s29 = scalar_select %p28, 0, %s27
      %s30 = sadd.s32 1, %s21
      %s31 = scalar_select %p28, %s30, %s21
      %p32 = scmp.ge.s32.totalorder %s31, 1
      %s33 = scalar_select %p32, 0, %s31
      %s34 = ssub.s32 %s22, %s29
      %s35 = ssub.s32 %s21, %s33
      %s36 = sor.u32 %s34, %s35
      %p37 = scmp.eq.s32.totalorder %s36, 0
      %s39 = sadd.s32 %s38, 1
      %s40 = scalar_select %p37, %s38, %s39
      %p43 = pneg %p37
      %p44 = scmp.eq.s32.totalorder %s14, 1
      %p45 = por %p43, %p44
      %p46 = scmp.ne.s32.totalorder %s38, %s41
      %p47 = scmp.eq.s32.totalorder %s14, 0
      %p48 = por %p46, %p47
      %p49 = scmp.ne.s32.totalorder %s38, %s41
      %p50 = scmp.eq.s32.totalorder %s19, 1
      %p51 = por %p49, %p50
      %p52 = scmp.ne.s32.totalorder %s41, %s42
      %p53 = scmp.eq.s32.totalorder %s19, 0
      %p54 = por %p52, %p53
      %p55 = scmp.ne.s32.totalorder %s41, %s42
      %p56 = scmp.eq.s32.totalorder %s20, 1
      %p57 = por %p55, %p56
      %p59 = scmp.ne.s32.totalorder %s42, %s58
      %p60 = scmp.eq.s32.totalorder %s20, 0
      %p61 = por %p59, %p60
      %s62 = ssub.s32 %s21, %s33
      %p63 = scmp.eq.s32.totalorder %s62, 0
      %s65 = sadd.s32 %s64, 1
      %s66 = scalar_select %p63, %s64, %s65
      %p69 = pneg %p63
      %p70 = scmp.eq.s32.totalorder %s14, 1
      %p71 = por %p69, %p70
      %p72 = scmp.ne.s32.totalorder %s64, %s67
      %p73 = scmp.eq.s32.totalorder %s14, 0
      %p74 = por %p72, %p73
      %p75 = scmp.ne.s32.totalorder %s64, %s67
      %p76 = scmp.eq.s32.totalorder %s19, 1
      %p77 = por %p75, %p76
      %p78 = scmp.ne.s32.totalorder %s67, %s68
      %p79 = scmp.eq.s32.totalorder %s19, 0
      %p80 = por %p78, %p79
      %p81 = scmp.ne.s32.totalorder %s67, %s68
      %p82 = scmp.eq.s32.totalorder %s20, 1
      %p83 = por %p81, %p82
      %p85 = scmp.ne.s32.totalorder %s68, %s84
      %p86 = scmp.eq.s32.totalorder %s20, 0
      %p87 = por %p85, %p86
      %s88 = ssub.s32 %s22, %s29
      %s89 = ssub.s32 %s21, %s33
      %s90 = sor.u32 %s88, %s89
      %p91 = scmp.eq.s32.totalorder %s90, 0
      %s93 = sadd.s32 %s92, 1
      %s94 = scalar_select %p91, %s92, %s93
      %p97 = pneg %p91
      %p98 = scmp.eq.s32.totalorder %s14, 1
      %p99 = por %p97, %p98
      %p100 = scmp.ne.s32.totalorder %s92, %s95
      %p101 = scmp.eq.s32.totalorder %s14, 0
      %p102 = por %p100, %p101
      %p103 = scmp.ne.s32.totalorder %s92, %s95
      %p104 = scmp.eq.s32.totalorder %s19, 1
      %p105 = por %p103, %p104
      %p106 = scmp.ne.s32.totalorder %s95, %s96
      %p107 = scmp.eq.s32.totalorder %s19, 0
      %p108 = por %p106, %p107
      %p109 = scmp.ne.s32.totalorder %s95, %s96
      %p110 = scmp.eq.s32.totalorder %s20, 1
      %p111 = por %p109, %p110
      %p113 = scmp.ne.s32.totalorder %s96, %s112
      %p114 = scmp.eq.s32.totalorder %s20, 0
      %p115 = por %p113, %p114
      %p116 = scmp.le.s32.totalorder 1, %s14
      %p117 = scmp.lt.s32.totalorder %s14, 3
      %p118 = pnand %p116, %p117
      %p119 = pneg %p118
      // Predicated region
      $region9: #{tpu_custom_call.1} parent=5 // pred_check
        _
      $region10: #{tpu_custom_call.1} parent=5 // pred_check_branch
        %121 = sbr.rel (%p118) target = $region12
      $region11: #{tpu_custom_call.1} parent=5 // pred_region
        %s122 = ssub.s32 %s14, 1
        // Predicated region
        $region13: #{tpu_custom_call.1} parent=11 // pred_check
          %p123 = pneg %p80
        $region14: #{tpu_custom_call.1} parent=11 // pred_check_branch
          %125 = sbr.rel (%p123) target = $region16
        $region15: #{tpu_custom_call.1} parent=11 // pred_region
          %p126 = scmp.lt.s32.totalorder %s23, 0
          %s127 = scalar_select %p126, %s23, 0
          %s128 = smul.addr %s127, 8
          %s129 = scalar_lea.vmem %s1, %s128
        $region16: #{tpu_custom_call.1} parent=11 // pred_fallthru
          _
      $region12: #{tpu_custom_call.1} parent=5 // pred_fallthru
        _
      %p130 = scmp.lt.s32.totalorder %s14, 2
      // Predicated region
      $region17: #{tpu_custom_call.1} parent=5 // pred_check
        %p131 = pneg %p130
      $region18: #{tpu_custom_call.1} parent=5 // pred_check_branch
        %133 = sbr.rel (%p131) target = $region20
      $region19: #{tpu_custom_call.1} parent=5 // pred_region
        // Predicated region
        $region21: #{tpu_custom_call.1} parent=19 // pred_check
          %p134 = pneg %p48
        $region22: #{tpu_custom_call.1} parent=19 // pred_check_branch
          %136 = sbr.rel (%p134) target = $region24
        $region23: #{tpu_custom_call.1} parent=19 // pred_region
          %s137 = sand.u32 %s38, 1
          %s138 = scalar_lea.sflag [#allocation3], %s137
          %s139 = sand.u32 %s38, 1
          %s140 = smul.addr %s139, 8
          %s141 = scalar_lea.vmem [#allocation2], %s140
          %s143 = ssub.s32 128, 128
          %144 = vsyncadd %s138, %s143
          %s145 = sadd.s32 %s21, %s22
          %s146 = smul.addr %s145, 128
          %s147 = scalar_lea.hbm %s0, %s146
          %s149 = sshll.u32 %s141, 4
          %s150 = int_to_ptr.vmem [resolvable:$true] %s149
          %152 = dma.hbm_to_vmem [thread:$0]  %s147, 128, %s150, %s138
        $region24: #{tpu_custom_call.1} parent=19 // pred_fallthru
          _
      $region20: #{tpu_custom_call.1} parent=5 // pred_fallthru
        _
      %p153 = scmp.le.s32.totalorder 1, %s14
      %p154 = scmp.lt.s32.totalorder %s14, 3
      %p155 = pnand %p153, %p154
      %p156 = pneg %p155
      // Predicated region
      $region25: #{tpu_custom_call.1} parent=5 // pred_check
        _
      $region26: #{tpu_custom_call.1} parent=5 // pred_check_branch
        %158 = sbr.rel (%p155) target = $region28
      $region27: #{tpu_custom_call.1} parent=5 // pred_region
        %s159 = ssub.s32 %s14, 1
        %s160 = sand.u32 %s41, 1
        %s161 = scalar_lea.sflag [#allocation3], %s160
        %s162 = sand.u32 %s41, 1
        %s163 = smul.addr %s162, 8
        %s164 = scalar_lea.vmem [#allocation2], %s163
        // Predicated region
        $region29: #{tpu_custom_call.1} parent=27 // pred_check
          %p165 = pneg %p54
        $region30: #{tpu_custom_call.1} parent=27 // pred_check_branch
          %167 = sbr.rel (%p165) target = $region32
        $region31: #{tpu_custom_call.1} parent=27 // pred_region
          %168 = dma.done %s161, 128
        $region32: #{tpu_custom_call.1} parent=27 // pred_fallthru
          _
        %s169 = sand.u32 %s41, 1
        %s170 = scalar_lea.sflag [#allocation3], %s169
        %s171 = sand.u32 %s41, 1
        %s172 = smul.addr %s171, 8
        %s173 = scalar_lea.vmem [#allocation2], %s172
        %p174 = pneg %p54
        %p175 = pneg %p51
        %p176 = scmp.lt.s32.totalorder %s23, 0
        %s177 = scalar_select %p176, %s23, 0
        %s178 = smul.addr %s177, 8
        %s179 = scalar_lea.vmem %s1, %s178
        %p180 = pneg %p80
        %p181 = pneg %p77
        %p182 = pneg %p108
        %p183 = pneg %p105
        %s184 = sand.u32 %s95, 1
        %s185 = scalar_lea.sflag [#allocation4], %s184
        %s186 = sand.u32 %s95, 1
        %s187 = smul.addr %s186, 8
        %s188 = scalar_lea.vmem [#allocation5], %s187
        %p189 = scmp.lt.s32.totalorder %s23, 0
        %s190 = scalar_select %p189, %s23, 0
        %s191 = smul.addr %s190, 8
        %s192 = scalar_lea.vmem %s1, %s191
        %v193 = vld [vmem:[%s164] sm:$0xff]
        %v194 = vld [vmem:[%s192] sm:$0xff]
        %v195 = vadd.f32 %v193, %v194
        %196 = vst [vmem:[%s188] sm:$0xff] %v195
        %s197 = sand.u32 %s95, 1
        %s198 = scalar_lea.sflag [#allocation4], %s197
        %s199 = sand.u32 %s95, 1
        %s200 = smul.addr %s199, 8
        %s201 = scalar_lea.vmem [#allocation5], %s200
        // Predicated region
        $region33: #{tpu_custom_call.1} parent=27 // pred_check
          %p202 = pneg %p105
        $region34: #{tpu_custom_call.1} parent=27 // pred_check_branch
          %204 = sbr.rel (%p202) target = $region36
        $region35: #{tpu_custom_call.1} parent=27 // pred_region
          %s206 = ssub.s32 128, 128
          %207 = vsyncadd %s198, %s206
          %s208 = sadd.s32 %s23, %s24
          %s209 = smul.addr %s208, 128
          %s210 = scalar_lea.hbm %s2, %s209
          %s212 = sshll.u32 %s201, 4
          %s213 = int_to_ptr.vmem [resolvable:$true] %s212
          %215 = dma.vmem_to_hbm [thread:$0]  %s213, 128, %s210, %s198
        $region36: #{tpu_custom_call.1} parent=27 // pred_fallthru
          _
      $region28: #{tpu_custom_call.1} parent=5 // pred_fallthru
        _
      %p216 = scmp.le.s32.totalorder 2, %s14
      // Predicated region
      $region37: #{tpu_custom_call.1} parent=5 // pred_check
        %p217 = pneg %p216
      $region38: #{tpu_custom_call.1} parent=5 // pred_check_branch
        %219 = sbr.rel (%p217) target = $region40
      $region39: #{tpu_custom_call.1} parent=5 // pred_region
        %s220 = ssub.s32 %s14, 2
        // Predicated region
        $region41: #{tpu_custom_call.1} parent=39 // pred_check
          %p221 = pneg %p111
        $region42: #{tpu_custom_call.1} parent=39 // pred_check_branch
          %223 = sbr.rel (%p221) target = $region44
        $region43: #{tpu_custom_call.1} parent=39 // pred_region
          %s224 = sand.u32 %s96, 1
          %s225 = scalar_lea.sflag [#allocation4], %s224
          %s226 = sand.u32 %s96, 1
          %s227 = smul.addr %s226, 8
          %s228 = scalar_lea.vmem [#allocation5], %s227
          %229 = dma.done %s225, 128
        $region44: #{tpu_custom_call.1} parent=39 // pred_fallthru
          _
      $region40: #{tpu_custom_call.1} parent=5 // pred_fallthru
        _
    $region6: #{tpu_custom_call.1} parent=1 // loop_footer
      %s18 = sadd.s32 1, %s14
    $region7: #{tpu_custom_call.1} parent=1 // loop_footer_branch
      %13 = sbr.rel target = $region3
    $region8: #{tpu_custom_call.1} parent=1 // loop_exit
      _
    %230 = vsyncpa [#allocation3], 1
    %s231 = scalar_lea.sflag [#allocation3], 1
    %232 = vsyncpa %s231, 1
    %233 = vsyncpa [#allocation4], 1
    %s234 = scalar_lea.sflag [#allocation4], 1
    %235 = vsyncpa %s234, 1

</llo_original>
